<compile_context>
chip_gen: v5e
topology: v5e:2x2
jax: 0.10.0
libtpu: 0.0.40
codegen_flags: <defaults>
</compile_context>

<pallas_src>
import functools

import jax
import jax.numpy as jnp
from jax import lax
from jax.experimental import pallas as pl
from jax.experimental.pallas import tpu as pltpu


def _round_up(x, m):
    return ((x + m - 1) // m) * m


def _cdiv(a, b):
    return (a + b - 1) // b


# --------------------------------------------------------------------------
# Hann window + onesided DFT basis (window folded into the basis), matching
# torch.stft(center=False, onesided=True, normalized=False).abs()
# --------------------------------------------------------------------------
def _hann_window(win_length):
    # torch.hann_window default is periodic=True
    n = jnp.arange(win_length, dtype=jnp.float32)
    return 0.5 - 0.5 * jnp.cos(2.0 * jnp.pi * n / win_length)


def _dft_basis_pair(n_fft, win_length):
    win = _hann_window(win_length)
    pad_left = (n_fft - win_length) // 2              # torch centers the window
    window = jnp.zeros((n_fft,), jnp.float32).at[pad_left:pad_left + win_length].set(win)
    num_freq = n_fft // 2 + 1
    n = jnp.arange(n_fft, dtype=jnp.float32)[:, None]
    f = jnp.arange(num_freq, dtype=jnp.float32)[None, :]
    ang = 2.0 * jnp.pi * n * f / n_fft
    cos_b = jnp.cos(ang) * window[:, None]            # (n_fft, F)
    sin_b = -jnp.sin(ang) * window[:, None]           # (n_fft, F)
    return cos_b.astype(jnp.float32), sin_b.astype(jnp.float32)


def _dft_basis_fused(n_fft, win_length, f_pad):
    """(n_fft, 2*f_pad): [cos | 0 | sin | 0], each half padded to f_pad lanes."""
    cos_b, sin_b = _dft_basis_pair(n_fft, win_length)
    num_freq = cos_b.shape[1]
    pad = f_pad - num_freq
    cos_p = jnp.pad(cos_b, ((0, 0), (0, pad)))
    sin_p = jnp.pad(sin_b, ((0, 0), (0, pad)))
    return jnp.concatenate([cos_p, sin_p], axis=1)    # (n_fft, 2*f_pad)


# --------------------------------------------------------------------------
# Pallas kernel.  Per grid step (b, i):
#   - rebuild tile_m overlapping frames for pred AND target from the raw
#     hop-row signal blocks into one (2*tile_m, n_fft) VMEM scratch
#   - one bf16 MXU matmul against the fused windowed DFT basis
#   - fold partial sums (VPU adds only) into a lane-dense (3, 8, F_pad) slab:
#       out[0] = sum (t_mag - p_mag)^2
#       out[1] = sum  t_mag^2
#       out[2] = sum |log p_mag - log t_mag|
# --------------------------------------------------------------------------
def _stft_loss_kernel(pc_ref, pn_ref, tc_ref, tn_ref, basis_ref, out_ref, fr_ref,
                      *, tile_m, hop, n_fft, f_pad, r, num_frames, num_tiles):
    # ---- in-kernel framing: r static slice copies per signal --------------
    def build(cur_ref, nxt_ref, row0):
        for k in range(r):
            c0 = k * hop
            w = min(hop, n_fft - c0)
            # frame m, columns [c0, c0+w) come from hop-row (m + k) of the signal
            fr_ref[row0:row0 + tile_m - k, c0:c0 + w] = cur_ref[k:tile_m, 0:w]
            if k > 0:  # last k frames spill into the next hop-row block
                fr_ref[row0 + tile_m - k:row0 + tile_m, c0:c0 + w] = nxt_ref[0:k, 0:w]

    build(pc_ref, pn_ref, 0)            # pred frames  -> rows [0, tile_m)
    build(tc_ref, tn_ref, tile_m)       # target frames -> rows [tile_m, 2*tile_m)

    # Frames past num_frames in the last tile read leftover real samples;
    # zero them (padded frequency lanes are already zero via the basis).
    pad_rows = num_tiles * tile_m - num_frames
    if pad_rows > 0:
        @pl.when(pl.program_id(1) == num_tiles - 1)
        def _zero_padded_frames():
            v = tile_m - pad_rows
            z = jnp.zeros((pad_rows, n_fft), fr_ref.dtype)
            fr_ref[v:tile_m, :] = z
            fr_ref[tile_m + v:2 * tile_m, :] = z

    # ---- one fused MXU matmul for pred + target ----------------------------
    res = jnp.dot(fr_ref[...], basis_ref[...],
                  preferred_element_type=jnp.float32)        # (2*tile_m, 2*f_pad)

    p_re = res[:tile_m, :f_pad]
    p_im = res[:tile_m, f_pad:]
    t_re = res[tile_m:, :f_pad]
    t_im = res[tile_m:, f_pad:]

    p_pow = p_re * p_re + p_im * p_im
    t_pow = t_re * t_re + t_im * t_im

    # (t_mag - p_mag)^2 with a single sqrt (EUP) instead of two.
    sq_diff = p_pow + t_pow - 2.0 * jnp.sqrt(p_pow * t_pow)

    # |log p_mag - log t_mag| = 0.5*|log(p_pow+eps) - log(t_pow+eps)|;
    # zero-padded rows / lanes give log(eps) - log(eps) = 0 exactly.
    eps = 1e-12
    log_abs = 0.5 * jnp.abs(jnp.log(p_pow + eps) - jnp.log(t_pow + eps))

    # Fold the frame (sublane) axis down to one vreg-row of partials with pure
    # VPU adds; the final cross-lane reduction happens once in the wrapper.
    def fold(x):
        return jnp.sum(x.reshape(tile_m // 8, 8, f_pad), axis=0)   # (8, F_pad)

    out_ref[0] = fold(sq_diff)
    out_ref[1] = fold(t_pow)
    out_ref[2] = fold(log_abs)


@functools.partial(jax.jit, static_argnums=(2, 3, 4))
def stft_loss(predicts, targets, n_fft, hop_length, win_length):
    """Returns (sc_loss, mag_loss) matching STFTLoss.forward."""
    assert predicts.shape == targets.shape and predicts.ndim == 2
    B, T = predicts.shape
    assert T >= n_fft, "signal shorter than n_fft"

    num_freq = n_fft // 2 + 1
    f_pad = _round_up(num_freq, 128)
    num_frames = 1 + (T - n_fft) // hop_length
    r = _cdiv(n_fft, hop_length)                       # hop-rows per frame

    # ---- adaptive tile size: big for small FFTs, bounded for big (VMEM) ----
    if n_fft >= 2048:
        base = 128
    elif n_fft >= 1024:
        base = 256
    else:
        base = 512
    tile_floor = max(8, _round_up(r, 8))               # need >= r hop-rows / block
    tile_m = max(tile_floor, min(base, _round_up(num_frames, 8)))
    # keep at least 2 grid steps so both v7x TensorCores get work
    while B * _cdiv(num_frames, tile_m) < 2 and tile_m > tile_floor:
        tile_m = max(tile_floor, _round_up(tile_m // 2, 8))
    num_tiles = _cdiv(num_frames, tile_m)

    # ---- signals: bf16 early, pad, reshape to (B, rows, hop) (layout-only) -
    rows = (num_tiles + 1) * tile_m                    # +1 block for window overlap
    t_pad = rows * hop_length

    def prep(x):
        x = x.astype(jnp.bfloat16)
        x = x[:, :min(T, t_pad)]
        x = jnp.pad(x, ((0, 0), (0, t_pad - x.shape[1])))
        return x.reshape(B, rows, hop_length)

    sig_p = prep(predicts)
    sig_t = prep(targets)

    basis = _dft_basis_fused(n_fft, win_length, f_pad).astype(jnp.bfloat16)

    kernel = functools.partial(
        _stft_loss_kernel, tile_m=tile_m, hop=hop_length, n_fft=n_fft,
        f_pad=f_pad, r=r, num_frames=num_frames, num_tiles=num_tiles)

    # Rough VMEM budget; clamp to [32 MiB, 64 MiB] (valid on every generation,
    # v7x has 64 MiB physical VMEM).
    est = (4 * tile_m * hop_length * 2 * 2             # 4 signal streams, dbl-buf
           + 2 * n_fft * 2 * f_pad * 2                 # basis (conservative x2)
           + 2 * tile_m * n_fft * 2                    # frame scratch
           + 2 * tile_m * 2 * f_pad * 4                # matmul result
           + 8 * tile_m * f_pad * 4                    # f32 epilogue temporaries
           + 2 * 3 * 8 * f_pad * 4)                    # output block
    vmem_limit = int(min(64 * 2**20, max(32 * 2**20, 5 * est // 4)))

    cost = pl.CostEstimate(
        flops=2 * B * num_tiles * (2 * tile_m) * n_fft * (2 * f_pad),
        transcendentals=3 * B * num_tiles * tile_m * f_pad,
        bytes_accessed=(4 * B * num_tiles * tile_m * hop_length * 2
                        + n_fft * 2 * f_pad * 2
                        + B * num_tiles * 3 * 8 * f_pad * 4),
    )

    partials = pl.pallas_call(
        kernel,
        out_shape=jax.ShapeDtypeStruct((B, num_tiles, 3, 8, f_pad), jnp.float32),
        grid=(B, num_tiles),
        in_specs=[
            pl.BlockSpec((None, tile_m, hop_length), lambda b, i: (b, i, 0)),      # pred cur
            pl.BlockSpec((None, tile_m, hop_length), lambda b, i: (b, i + 1, 0)),  # pred next
            pl.BlockSpec((None, tile_m, hop_length), lambda b, i: (b, i, 0)),      # targ cur
            pl.BlockSpec((None, tile_m, hop_length), lambda b, i: (b, i + 1, 0)),  # targ next
            pl.BlockSpec((n_fft, 2 * f_pad), lambda b, i: (0, 0)),                 # fused basis
        ],
        out_specs=pl.BlockSpec((None, None, 3, 8, f_pad),
                               lambda b, i: (b, i, 0, 0, 0)),
        scratch_shapes=[pltpu.VMEM((2 * tile_m, n_fft), jnp.bfloat16)],
        compiler_params=pltpu.CompilerParams(
            dimension_semantics=("parallel", "parallel"),
            vmem_limit_bytes=vmem_limit),
        cost_estimate=cost,
    )(sig_p, sig_p, sig_t, sig_t, basis)

    sums = jnp.sum(partials, axis=(0, 1, 3, 4))        # (3,) f32
    sc_loss = jnp.sqrt(sums[0]) / jnp.sqrt(sums[1])
    mag_loss = sums[2] / (B * num_frames * num_freq)
    return sc_loss, mag_loss


# --------------------------------------------------------------------------
# Pure-JAX references (same math, no Pallas) for sanity checks.
#   emulate_bf16=True rounds the matmul inputs to bf16 (what the kernel does)
#   so the kernel logic can be checked tightly; emulate_bf16=False is the
#   full-f32 semantic reference.
# --------------------------------------------------------------------------
def _frame_ref(x, n_fft, hop_length):
    B, T = x.shape
    num_frames = 1 + (T - n_fft) // hop_length
    idx = (jnp.arange(num_frames)[:, None] * hop_length
           + jnp.arange(n_fft)[None, :])
    return x[:, idx].reshape(B * num_frames, n_fft)


def _stft_mag_ref(x, n_fft, hop_length, win_length, emulate_bf16):
    cos_b, sin_b = _dft_basis_pair(n_fft, win_length)
    frames = _frame_ref(x.astype(jnp.float32), n_fft, hop_length)
    if emulate_bf16:
        frames = frames.astype(jnp.bfloat16).astype(jnp.float32)
        cos_b = cos_b.astype(jnp.bfloat16).astype(jnp.float32)
        sin_b = sin_b.astype(jnp.bfloat16).astype(jnp.float32)
    re = jnp.dot(frames, cos_b, precision=lax.Precision.HIGHEST)
    im = jnp.dot(frames, sin_b, precision=lax.Precision.HIGHEST)
    return jnp.sqrt(re * re + im * im)


def _stft_loss_ref(predicts, targets, n_fft, hop_length, win_length,
                   emulate_bf16=False):
    p_mag = _stft_mag_ref(predicts, n_fft, hop_length, win_length, emulate_bf16)
    t_mag = _stft_mag_ref(targets, n_fft, hop_length, win_length, emulate_bf16)
    sc = jnp.linalg.norm(t_mag - p_mag) / jnp.linalg.norm(t_mag)
    mag = jnp.mean(jnp.abs(jnp.log(p_mag) - jnp.log(t_mag)))
    return sc, mag


if __name__ == "__main__":
    # Small, deterministic example: n_fft=64, hop=16, win=64, B=2, T=304
    #   -> num_frames = 1 + (304 - 64) // 16 = 16, F = 33 (F_pad = 128)
    n_fft, hop_length, win_length = 64, 16, 64
    B, T = 2, 304

    key = jax.random.PRNGKey(0)
    kp, kt = jax.random.split(key)
    predicts = jax.random.normal(kp, (B, T), dtype=jnp.float32)
    targets = jax.random.normal(kt, (B, T), dtype=jnp.float32)

    sc_loss, mag_loss = stft_loss(predicts, targets, n_fft, hop_length, win_length)
    sc_loss, mag_loss = jax.block_until_ready((sc_loss, mag_loss))

    # Tight check: same bf16 input rounding as the kernel -> validates kernel math.
    sc_t, mag_t = _stft_loss_ref(predicts, targets, n_fft, hop_length, win_length,
                                 emulate_bf16=True)
    assert jnp.allclose(sc_loss, sc_t, rtol=2e-3, atol=2e-4), (sc_loss, sc_t)
    assert jnp.allclose(mag_loss, mag_t, rtol=2e-3, atol=2e-4), (mag_loss, mag_t)

    # Loose check: full-f32 semantic reference (bf16 matmul inputs cost ~1e-3 rel).
    sc_r, mag_r = _stft_loss_ref(predicts, targets, n_fft, hop_length, win_length,
                                 emulate_bf16=False)
    assert jnp.allclose(sc_loss, sc_r, rtol=3e-2, atol=1e-2), (sc_loss, sc_r)
    assert jnp.allclose(mag_loss, mag_r, rtol=3e-2, atol=1e-2), (mag_loss, mag_r)

    print("KERNEL_OK")
</pallas_src>

<mosaic_0001>
module attributes {stable_mosaic.version = 11 : i64} {
  func.func @_stft_loss_kernel(%arg0: i32, %arg1: i32, %arg2: memref<1x16x16xbf16, #tpu.memory_space<vmem>>, %arg3: memref<1x16x16xbf16, #tpu.memory_space<vmem>>, %arg4: memref<1x16x16xbf16, #tpu.memory_space<vmem>>, %arg5: memref<1x16x16xbf16, #tpu.memory_space<vmem>>, %arg6: memref<64x256xbf16, #tpu.memory_space<vmem>>, %arg7: memref<1x1x3x8x128xf32, #tpu.memory_space<vmem>>, %arg8: memref<32x64xbf16, #tpu.memory_space<vmem>>) attributes {dimension_semantics = [#tpu.dimension_semantics<parallel>, #tpu.dimension_semantics<parallel>], iteration_bounds = array<i64: 2, 1>, scalar_prefetch = 0 : i64, scratch_operands = 1 : i64, tpu.core_type = #tpu.core_type<tc>, window_params = [{transform_indices = @transform_0, window_bounds = array<i64: 1, 16, 16>}, {transform_indices = @transform_1, window_bounds = array<i64: 1, 16, 16>}, {transform_indices = @transform_2, window_bounds = array<i64: 1, 16, 16>}, {transform_indices = @transform_3, window_bounds = array<i64: 1, 16, 16>}, {pipeline_mode = #tpu.pipeline_mode<synchronous>, transform_indices = @transform_4, window_bounds = array<i64: 64, 256>}, {transform_indices = @transform_5, window_bounds = array<i64: 1, 1, 3, 8, 128>}]} {
    %c0 = arith.constant 0 : index
    %c0_0 = arith.constant 0 : index
    %c0_1 = arith.constant 0 : index
    %0 = vector.load %arg2[%c0, %c0_0, %c0_1] : memref<1x16x16xbf16, #tpu.memory_space<vmem>>, vector<1x16x16xbf16>
    %1 = vector.shape_cast %0 : vector<1x16x16xbf16> to vector<16x16xbf16>
    %c0_2 = arith.constant 0 : index
    %c0_3 = arith.constant 0 : index
    %2 = vector.load %arg8[%c0_2, %c0_3] : memref<32x64xbf16, #tpu.memory_space<vmem>>, vector<16x16xbf16>
    tpu.vector_store %arg8[%c0_2, %c0_3], %1 {strides = array<i32>} : memref<32x64xbf16, #tpu.memory_space<vmem>>, vector<16x16xbf16>,
    %c0_4 = arith.constant 0 : index
    %c1 = arith.constant 1 : index
    %c0_5 = arith.constant 0 : index
    %3 = vector.load %arg2[%c0_4, %c1, %c0_5] : memref<1x16x16xbf16, #tpu.memory_space<vmem>>, vector<1x15x16xbf16>
    %4 = vector.shape_cast %3 : vector<1x15x16xbf16> to vector<15x16xbf16>
    %c0_6 = arith.constant 0 : index
    %c16 = arith.constant 16 : index
    %5 = vector.load %arg8[%c0_6, %c16] : memref<32x64xbf16, #tpu.memory_space<vmem>>, vector<15x16xbf16>
    tpu.vector_store %arg8[%c0_6, %c16], %4 {strides = array<i32>} : memref<32x64xbf16, #tpu.memory_space<vmem>>, vector<15x16xbf16>,
    %c0_7 = arith.constant 0 : index
    %c0_8 = arith.constant 0 : index
    %c0_9 = arith.constant 0 : index
    %6 = vector.load %arg3[%c0_7, %c0_8, %c0_9] : memref<1x16x16xbf16, #tpu.memory_space<vmem>>, vector<1x1x16xbf16>
    %7 = vector.shape_cast %6 : vector<1x1x16xbf16> to vector<1x16xbf16>
    %c15 = arith.constant 15 : index
    %c16_10 = arith.constant 16 : index
    %8 = vector.load %arg8[%c15, %c16_10] : memref<32x64xbf16, #tpu.memory_space<vmem>>, vector<1x16xbf16>
    tpu.vector_store %arg8[%c15, %c16_10], %7 {strides = array<i32>} : memref<32x64xbf16, #tpu.memory_space<vmem>>, vector<1x16xbf16>,
    %c0_11 = arith.constant 0 : index
    %c2 = arith.constant 2 : index
    %c0_12 = arith.constant 0 : index
    %9 = vector.load %arg2[%c0_11, %c2, %c0_12] : memref<1x16x16xbf16, #tpu.memory_space<vmem>>, vector<1x14x16xbf16>
    %10 = vector.shape_cast %9 : vector<1x14x16xbf16> to vector<14x16xbf16>
    %c0_13 = arith.constant 0 : index
    %c32 = arith.constant 32 : index
    %11 = vector.load %arg8[%c0_13, %c32] : memref<32x64xbf16, #tpu.memory_space<vmem>>, vector<14x16xbf16>
    tpu.vector_store %arg8[%c0_13, %c32], %10 {strides = array<i32>} : memref<32x64xbf16, #tpu.memory_space<vmem>>, vector<14x16xbf16>,
    %c0_14 = arith.constant 0 : index
    %c0_15 = arith.constant 0 : index
    %c0_16 = arith.constant 0 : index
    %12 = vector.load %arg3[%c0_14, %c0_15, %c0_16] : memref<1x16x16xbf16, #tpu.memory_space<vmem>>, vector<1x2x16xbf16>
    %13 = vector.shape_cast %12 : vector<1x2x16xbf16> to vector<2x16xbf16>
    %c14 = arith.constant 14 : index
    %c32_17 = arith.constant 32 : index
    %14 = vector.load %arg8[%c14, %c32_17] : memref<32x64xbf16, #tpu.memory_space<vmem>>, vector<2x16xbf16>
    tpu.vector_store %arg8[%c14, %c32_17], %13 {strides = array<i32>} : memref<32x64xbf16, #tpu.memory_space<vmem>>, vector<2x16xbf16>,
    %c0_18 = arith.constant 0 : index
    %c3 = arith.constant 3 : index
    %c0_19 = arith.constant 0 : index
    %15 = vector.load %arg2[%c0_18, %c3, %c0_19] : memref<1x16x16xbf16, #tpu.memory_space<vmem>>, vector<1x13x16xbf16>
    %16 = vector.shape_cast %15 : vector<1x13x16xbf16> to vector<13x16xbf16>
    %c0_20 = arith.constant 0 : index
    %c48 = arith.constant 48 : index
    %17 = vector.load %arg8[%c0_20, %c48] : memref<32x64xbf16, #tpu.memory_space<vmem>>, vector<13x16xbf16>
    tpu.vector_store %arg8[%c0_20, %c48], %16 {strides = array<i32>} : memref<32x64xbf16, #tpu.memory_space<vmem>>, vector<13x16xbf16>,
    %c0_21 = arith.constant 0 : index
    %c0_22 = arith.constant 0 : index
    %c0_23 = arith.constant 0 : index
    %18 = vector.load %arg3[%c0_21, %c0_22, %c0_23] : memref<1x16x16xbf16, #tpu.memory_space<vmem>>, vector<1x3x16xbf16>
    %19 = vector.shape_cast %18 : vector<1x3x16xbf16> to vector<3x16xbf16>
    %c13 = arith.constant 13 : index
    %c48_24 = arith.constant 48 : index
    %20 = vector.load %arg8[%c13, %c48_24] : memref<32x64xbf16, #tpu.memory_space<vmem>>, vector<3x16xbf16>
    tpu.vector_store %arg8[%c13, %c48_24], %19 {strides = array<i32>} : memref<32x64xbf16, #tpu.memory_space<vmem>>, vector<3x16xbf16>,
    %c0_25 = arith.constant 0 : index
    %c0_26 = arith.constant 0 : index
    %c0_27 = arith.constant 0 : index
    %21 = vector.load %arg4[%c0_25, %c0_26, %c0_27] : memref<1x16x16xbf16, #tpu.memory_space<vmem>>, vector<1x16x16xbf16>
    %22 = vector.shape_cast %21 : vector<1x16x16xbf16> to vector<16x16xbf16>
    %c16_28 = arith.constant 16 : index
    %c0_29 = arith.constant 0 : index
    %23 = vector.load %arg8[%c16_28, %c0_29] : memref<32x64xbf16, #tpu.memory_space<vmem>>, vector<16x16xbf16>
    tpu.vector_store %arg8[%c16_28, %c0_29], %22 {strides = array<i32>} : memref<32x64xbf16, #tpu.memory_space<vmem>>, vector<16x16xbf16>,
    %c0_30 = arith.constant 0 : index
    %c1_31 = arith.constant 1 : index
    %c0_32 = arith.constant 0 : index
    %24 = vector.load %arg4[%c0_30, %c1_31, %c0_32] : memref<1x16x16xbf16, #tpu.memory_space<vmem>>, vector<1x15x16xbf16>
    %25 = vector.shape_cast %24 : vector<1x15x16xbf16> to vector<15x16xbf16>
    %c16_33 = arith.constant 16 : index
    %c16_34 = arith.constant 16 : index
    %26 = vector.load %arg8[%c16_33, %c16_34] : memref<32x64xbf16, #tpu.memory_space<vmem>>, vector<15x16xbf16>
    tpu.vector_store %arg8[%c16_33, %c16_34], %25 {strides = array<i32>} : memref<32x64xbf16, #tpu.memory_space<vmem>>, vector<15x16xbf16>,
    %c0_35 = arith.constant 0 : index
    %c0_36 = arith.constant 0 : index
    %c0_37 = arith.constant 0 : index
    %27 = vector.load %arg5[%c0_35, %c0_36, %c0_37] : memref<1x16x16xbf16, #tpu.memory_space<vmem>>, vector<1x1x16xbf16>
    %28 = vector.shape_cast %27 : vector<1x1x16xbf16> to vector<1x16xbf16>
    %c31 = arith.constant 31 : index
    %c16_38 = arith.constant 16 : index
    %29 = vector.load %arg8[%c31, %c16_38] : memref<32x64xbf16, #tpu.memory_space<vmem>>, vector<1x16xbf16>
    tpu.vector_store %arg8[%c31, %c16_38], %28 {strides = array<i32>} : memref<32x64xbf16, #tpu.memory_space<vmem>>, vector<1x16xbf16>,
    %c0_39 = arith.constant 0 : index
    %c2_40 = arith.constant 2 : index
    %c0_41 = arith.constant 0 : index
    %30 = vector.load %arg4[%c0_39, %c2_40, %c0_41] : memref<1x16x16xbf16, #tpu.memory_space<vmem>>, vector<1x14x16xbf16>
    %31 = vector.shape_cast %30 : vector<1x14x16xbf16> to vector<14x16xbf16>
    %c16_42 = arith.constant 16 : index
    %c32_43 = arith.constant 32 : index
    %32 = vector.load %arg8[%c16_42, %c32_43] : memref<32x64xbf16, #tpu.memory_space<vmem>>, vector<14x16xbf16>
    tpu.vector_store %arg8[%c16_42, %c32_43], %31 {strides = array<i32>} : memref<32x64xbf16, #tpu.memory_space<vmem>>, vector<14x16xbf16>,
    %c0_44 = arith.constant 0 : index
    %c0_45 = arith.constant 0 : index
    %c0_46 = arith.constant 0 : index
    %33 = vector.load %arg5[%c0_44, %c0_45, %c0_46] : memref<1x16x16xbf16, #tpu.memory_space<vmem>>, vector<1x2x16xbf16>
    %34 = vector.shape_cast %33 : vector<1x2x16xbf16> to vector<2x16xbf16>
    %c30 = arith.constant 30 : index
    %c32_47 = arith.constant 32 : index
    %35 = vector.load %arg8[%c30, %c32_47] : memref<32x64xbf16, #tpu.memory_space<vmem>>, vector<2x16xbf16>
    tpu.vector_store %arg8[%c30, %c32_47], %34 {strides = array<i32>} : memref<32x64xbf16, #tpu.memory_space<vmem>>, vector<2x16xbf16>,
    %c0_48 = arith.constant 0 : index
    %c3_49 = arith.constant 3 : index
    %c0_50 = arith.constant 0 : index
    %36 = vector.load %arg4[%c0_48, %c3_49, %c0_50] : memref<1x16x16xbf16, #tpu.memory_space<vmem>>, vector<1x13x16xbf16>
    %37 = vector.shape_cast %36 : vector<1x13x16xbf16> to vector<13x16xbf16>
    %c16_51 = arith.constant 16 : index
    %c48_52 = arith.constant 48 : index
    %38 = vector.load %arg8[%c16_51, %c48_52] : memref<32x64xbf16, #tpu.memory_space<vmem>>, vector<13x16xbf16>
    tpu.vector_store %arg8[%c16_51, %c48_52], %37 {strides = array<i32>} : memref<32x64xbf16, #tpu.memory_space<vmem>>, vector<13x16xbf16>,
    %c0_53 = arith.constant 0 : index
    %c0_54 = arith.constant 0 : index
    %c0_55 = arith.constant 0 : index
    %39 = vector.load %arg5[%c0_53, %c0_54, %c0_55] : memref<1x16x16xbf16, #tpu.memory_space<vmem>>, vector<1x3x16xbf16>
    %40 = vector.shape_cast %39 : vector<1x3x16xbf16> to vector<3x16xbf16>
    %c29 = arith.constant 29 : index
    %c48_56 = arith.constant 48 : index
    %41 = vector.load %arg8[%c29, %c48_56] : memref<32x64xbf16, #tpu.memory_space<vmem>>, vector<3x16xbf16>
    tpu.vector_store %arg8[%c29, %c48_56], %40 {strides = array<i32>} : memref<32x64xbf16, #tpu.memory_space<vmem>>, vector<3x16xbf16>,
    %c0_57 = arith.constant 0 : index
    %c0_58 = arith.constant 0 : index
    %42 = vector.load %arg8[%c0_57, %c0_58] : memref<32x64xbf16, #tpu.memory_space<vmem>>, vector<32x64xbf16>
    %c0_59 = arith.constant 0 : index
    %c0_60 = arith.constant 0 : index
    %43 = vector.load %arg6[%c0_59, %c0_60] : memref<64x256xbf16, #tpu.memory_space<vmem>>, vector<64x256xbf16>
    %cst = arith.constant dense<0.000000e+00> : vector<32x256xf32>
    %44 = tpu.matmul %42, %43, %cst {dimension_numbers = #tpu.dot_dimension_numbers<[1], [0], [0], [1], [0, 0, 1, 1], [], []>} : vector<32x64xbf16>, vector<64x256xbf16>, vector<32x256xf32> -> vector<32x256xf32>
    %45 = vector.extract_strided_slice %44 {offsets = [0, 0], sizes = [16, 128], strides = [1, 1]} : vector<32x256xf32> to vector<16x128xf32>
    %46 = vector.extract_strided_slice %44 {offsets = [0, 128], sizes = [16, 128], strides = [1, 1]} : vector<32x256xf32> to vector<16x128xf32>
    %47 = vector.extract_strided_slice %44 {offsets = [16, 0], sizes = [16, 128], strides = [1, 1]} : vector<32x256xf32> to vector<16x128xf32>
    %48 = vector.extract_strided_slice %44 {offsets = [16, 128], sizes = [16, 128], strides = [1, 1]} : vector<32x256xf32> to vector<16x128xf32>
    %49 = arith.mulf %45, %45 : vector<16x128xf32>
    %50 = arith.mulf %46, %46 : vector<16x128xf32>
    %51 = arith.addf %49, %50 : vector<16x128xf32>
    %52 = arith.mulf %47, %47 : vector<16x128xf32>
    %53 = arith.mulf %48, %48 : vector<16x128xf32>
    %54 = arith.addf %52, %53 : vector<16x128xf32>
    %55 = arith.addf %51, %54 : vector<16x128xf32>
    %56 = arith.mulf %51, %54 : vector<16x128xf32>
    %57 = math.sqrt %56 : vector<16x128xf32>
    %cst_61 = arith.constant 2.000000e+00 : f32
    %58 = vector.broadcast %cst_61 : f32 to vector<16x128xf32>
    %59 = arith.mulf %58, %57 : vector<16x128xf32>
    %60 = arith.subf %55, %59 : vector<16x128xf32>
    %cst_62 = arith.constant 9.99999996E-13 : f32
    %61 = vector.broadcast %cst_62 : f32 to vector<16x128xf32>
    %62 = arith.addf %51, %61 : vector<16x128xf32>
    %63 = math.log %62 : vector<16x128xf32>
    %cst_63 = arith.constant 9.99999996E-13 : f32
    %64 = vector.broadcast %cst_63 : f32 to vector<16x128xf32>
    %65 = arith.addf %54, %64 : vector<16x128xf32>
    %66 = math.log %65 : vector<16x128xf32>
    %67 = arith.subf %63, %66 : vector<16x128xf32>
    %68 = math.absf %67 : vector<16x128xf32>
    %cst_64 = arith.constant 5.000000e-01 : f32
    %69 = vector.broadcast %cst_64 : f32 to vector<16x128xf32>
    %70 = arith.mulf %69, %68 : vector<16x128xf32>
    %71 = vector.shape_cast %60 : vector<16x128xf32> to vector<2x8x128xf32>
    %cst_65 = arith.constant dense<0.000000e+00> : vector<8x128xf32>
    %72 = vector.multi_reduction <add>, %71, %cst_65 [0] : vector<2x8x128xf32> to vector<8x128xf32>
    %c0_66 = arith.constant 0 : index
    %c0_67 = arith.constant 0 : index
    %c0_68 = arith.constant 0 : index
    %c0_69 = arith.constant 0 : index
    %c0_70 = arith.constant 0 : index
    %73 = vector.load %arg7[%c0_66, %c0_67, %c0_68, %c0_69, %c0_70] : memref<1x1x3x8x128xf32, #tpu.memory_space<vmem>>, vector<1x1x1x8x128xf32>
    %74 = vector.shape_cast %73 : vector<1x1x1x8x128xf32> to vector<8x128xf32>
    %75 = vector.shape_cast %72 : vector<8x128xf32> to vector<1x1x1x8x128xf32>
    tpu.vector_store %arg7[%c0_66, %c0_67, %c0_68, %c0_69, %c0_70], %75 {strides = array<i32>} : memref<1x1x3x8x128xf32, #tpu.memory_space<vmem>>, vector<1x1x1x8x128xf32>,
    %76 = vector.shape_cast %54 : vector<16x128xf32> to vector<2x8x128xf32>
    %cst_71 = arith.constant dense<0.000000e+00> : vector<8x128xf32>
    %77 = vector.multi_reduction <add>, %76, %cst_71 [0] : vector<2x8x128xf32> to vector<8x128xf32>
    %c0_72 = arith.constant 0 : index
    %c0_73 = arith.constant 0 : index
    %c1_74 = arith.constant 1 : index
    %c0_75 = arith.constant 0 : index
    %c0_76 = arith.constant 0 : index
    %78 = vector.load %arg7[%c0_72, %c0_73, %c1_74, %c0_75, %c0_76] : memref<1x1x3x8x128xf32, #tpu.memory_space<vmem>>, vector<1x1x1x8x128xf32>
    %79 = vector.shape_cast %78 : vector<1x1x1x8x128xf32> to vector<8x128xf32>
    %80 = vector.shape_cast %77 : vector<8x128xf32> to vector<1x1x1x8x128xf32>
    tpu.vector_store %arg7[%c0_72, %c0_73, %c1_74, %c0_75, %c0_76], %80 {strides = array<i32>} : memref<1x1x3x8x128xf32, #tpu.memory_space<vmem>>, vector<1x1x1x8x128xf32>,
    %81 = vector.shape_cast %70 : vector<16x128xf32> to vector<2x8x128xf32>
    %cst_77 = arith.constant dense<0.000000e+00> : vector<8x128xf32>
    %82 = vector.multi_reduction <add>, %81, %cst_77 [0] : vector<2x8x128xf32> to vector<8x128xf32>
    %c0_78 = arith.constant 0 : index
    %c0_79 = arith.constant 0 : index
    %c2_80 = arith.constant 2 : index
    %c0_81 = arith.constant 0 : index
    %c0_82 = arith.constant 0 : index
    %83 = vector.load %arg7[%c0_78, %c0_79, %c2_80, %c0_81, %c0_82] : memref<1x1x3x8x128xf32, #tpu.memory_space<vmem>>, vector<1x1x1x8x128xf32>
    %84 = vector.shape_cast %83 : vector<1x1x1x8x128xf32> to vector<8x128xf32>
    %85 = vector.shape_cast %82 : vector<8x128xf32> to vector<1x1x1x8x128xf32>
    tpu.vector_store %arg7[%c0_78, %c0_79, %c2_80, %c0_81, %c0_82], %85 {strides = array<i32>} : memref<1x1x3x8x128xf32, #tpu.memory_space<vmem>>, vector<1x1x1x8x128xf32>,
    return
  }
  func.func @transform_0(%arg0: i32, %arg1: i32) -> (i32, i32, i32) {
    %c0_i32 = arith.constant 0 : i32
    %c0_i32_0 = arith.constant 0 : i32
    return %arg0, %arg1, %c0_i32 : i32, i32, i32
  }
  func.func @transform_1(%arg0: i32, %arg1: i32) -> (i32, i32, i32) {
    %c1_i32 = arith.constant 1 : i32
    %0 = arith.addi %arg1, %c1_i32 : i32
    %c0_i32 = arith.constant 0 : i32
    %c0_i32_0 = arith.constant 0 : i32
    return %arg0, %0, %c0_i32 : i32, i32, i32
  }
  func.func @transform_2(%arg0: i32, %arg1: i32) -> (i32, i32, i32) {
    %c0_i32 = arith.constant 0 : i32
    %c0_i32_0 = arith.constant 0 : i32
    return %arg0, %arg1, %c0_i32 : i32, i32, i32
  }
  func.func @transform_3(%arg0: i32, %arg1: i32) -> (i32, i32, i32) {
    %c1_i32 = arith.constant 1 : i32
    %0 = arith.addi %arg1, %c1_i32 : i32
    %c0_i32 = arith.constant 0 : i32
    %c0_i32_0 = arith.constant 0 : i32
    return %arg0, %0, %c0_i32 : i32, i32, i32
  }
  func.func @transform_4(%arg0: i32, %arg1: i32) -> (i32, i32) {
    %c0_i32 = arith.constant 0 : i32
    %c0_i32_0 = arith.constant 0 : i32
    %c0_i32_1 = arith.constant 0 : i32
    return %c0_i32, %c0_i32_0 : i32, i32
  }
  func.func @transform_5(%arg0: i32, %arg1: i32) -> (i32, i32, i32, i32, i32) {
    %c0_i32 = arith.constant 0 : i32
    %c0_i32_0 = arith.constant 0 : i32
    %c0_i32_1 = arith.constant 0 : i32
    %c0_i32_2 = arith.constant 0 : i32
    return %arg0, %arg1, %c0_i32, %c0_i32_0, %c0_i32_1 : i32, i32, i32, i32, i32
  }
}

</mosaic_0001>

<llo_original>
// kernel: stft_loss.1
$region0: #{stft_loss.1}
  #allocation0 [shape = 'u32[]', space=smem, size = 0x4, offset = 0x4, fixed_abs, tag = 'smem constant byte address 0x4 - core index']
  #allocation1 [shape = 'u32[72,128]{1,0:T(1,128)}', space=vmem, size = 0x9000, scoped, tag = 'internal scratch']
  #allocation2 [shape = 'bf16[32,64]{1,0:T(8,128)(2,1)}', space=vmem, size = 0x2000, scoped, tag = 'scratch operand']
  %s0 = inlined_call_operand.vmem [shape: bf16[2,32,16], index: 0, kind: input, shape index: {}, may-alias: {0,1}]
  %s1 = inlined_call_operand.vmem [shape: bf16[2,32,16], index: 1, kind: input, shape index: {}, may-alias: {0,1}]
  %s2 = inlined_call_operand.vmem [shape: bf16[2,32,16], index: 2, kind: input, shape index: {}, may-alias: {2,3}]
  %s3 = inlined_call_operand.vmem [shape: bf16[2,32,16], index: 3, kind: input, shape index: {}, may-alias: {2,3}]
  %s4 = inlined_call_operand.vmem [shape: bf16[64,256], index: 4, kind: input, shape index: {}]
  %s5 = inlined_call_operand.vmem [shape: f32[2,1,3,8,128], index: 5, kind: output, shape index: {}]
  %s6 = sld [smem:[#allocation0]]
  $region53: #{stft_loss.1} parent=0
    _
  %s8 = ssub.s32 1, %s6
  %s9 = scalar_select 0, %s8, %s6
  loop: start=0, step=1, limit=4
  $region2: #{stft_loss.1} parent=0 // loop_pre_header
    _
  $region3: #{stft_loss.1} parent=0 // loop_header
    %s11 = sphi 0, %s15
    %p12 = scmp.ge.s32.totalorder %s11, 4
    %s18 = sphi 0, %s30
    %s19 = sphi 0, %s26
    %s20 = sphi 0, %s18
    %s21 = sphi 0, %s19
    %s22 = sphi 0, %s20
    %s23 = sphi 0, %s21
    %s35 = sphi 0, %s37
    %s38 = sphi 0, %s35
    %s39 = sphi 0, %s38
    %s55 = sphi 0, %s39
    %s65 = sphi 0, %s67
    %s68 = sphi 0, %s65
    %s69 = sphi 0, %s68
    %s85 = sphi 0, %s69
    %s93 = sphi 0, %s95
    %s96 = sphi 0, %s93
    %s97 = sphi 0, %s96
    %s113 = sphi 0, %s97
    %s123 = sphi 0, %s125
    %s126 = sphi 0, %s123
    %s127 = sphi 0, %s126
    %s143 = sphi 0, %s127
    %s147 = sphi 0, %s147
    %s149 = sphi 0, %s147
    %s150 = sphi 0, %s149
    %s164 = sphi 0, %s150
    %s172 = sphi 0, %s174
    %s175 = sphi 0, %s172
    %s176 = sphi 0, %s175
    %s192 = sphi 0, %s176
  $region4: #{stft_loss.1} parent=0 // loop_header_branch
    %14 = sbr.rel (%p12) target = $region8
  $region5: #{stft_loss.1} parent=0 // loop_body
    %s16 = ssub.s32 %s11, 1
    %s17 = ssub.s32 %s11, 2
    %s24 = sadd.s32 1, %s19
    %p25 = scmp.ge.s32.totalorder %s24, 1
    %s26 = scalar_select %p25, 0, %s24
    %s27 = sadd.s32 1, %s18
    %s28 = scalar_select %p25, %s27, %s18
    %p29 = scmp.ge.s32.totalorder %s28, 2
    %s30 = scalar_select %p29, 0, %s28
    %s31 = ssub.s32 %s18, %s30
    %s32 = ssub.s32 %s19, %s26
    %s33 = sor.u32 %s31, %s32
    %p34 = scmp.eq.s32.totalorder %s33, 0
    %s36 = sadd.s32 %s35, 1
    %s37 = scalar_select %p34, %s35, %s36
    %p40 = pneg %p34
    %p41 = scmp.eq.s32.totalorder %s11, 1
    %p42 = por %p40, %p41
    %p43 = scmp.ne.s32.totalorder %s35, %s38
    %p44 = scmp.eq.s32.totalorder %s11, 0
    %p45 = por %p43, %p44
    %p46 = scmp.ne.s32.totalorder %s35, %s38
    %p47 = scmp.eq.s32.totalorder %s16, 1
    %p48 = por %p46, %p47
    %p49 = scmp.ne.s32.totalorder %s38, %s39
    %p50 = scmp.eq.s32.totalorder %s16, 0
    %p51 = por %p49, %p50
    %p52 = scmp.ne.s32.totalorder %s38, %s39
    %p53 = scmp.eq.s32.totalorder %s17, 1
    %p54 = por %p52, %p53
    %p56 = scmp.ne.s32.totalorder %s39, %s55
    %p57 = scmp.eq.s32.totalorder %s17, 0
    %p58 = por %p56, %p57
    %s59 = sadd.s32 %s19, 1
    %s60 = sadd.s32 %s26, 1
    %s61 = ssub.s32 %s18, %s30
    %s62 = ssub.s32 %s59, %s60
    %s63 = sor.u32 %s61, %s62
    %p64 = scmp.eq.s32.totalorder %s63, 0
    %s66 = sadd.s32 %s65, 1
    %s67 = scalar_select %p64, %s65, %s66
    %p70 = pneg %p64
    %p71 = scmp.eq.s32.totalorder %s11, 1
    %p72 = por %p70, %p71
    %p73 = scmp.ne.s32.totalorder %s65, %s68
    %p74 = scmp.eq.s32.totalorder %s11, 0
    %p75 = por %p73, %p74
    %p76 = scmp.ne.s32.totalorder %s65, %s68
    %p77 = scmp.eq.s32.totalorder %s16, 1
    %p78 = por %p76, %p77
    %p79 = scmp.ne.s32.totalorder %s68, %s69
    %p80 = scmp.eq.s32.totalorder %s16, 0
    %p81 = por %p79, %p80
    %p82 = scmp.ne.s32.totalorder %s68, %s69
    %p83 = scmp.eq.s32.totalorder %s17, 1
    %p84 = por %p82, %p83
    %p86 = scmp.ne.s32.totalorder %s69, %s85
    %p87 = scmp.eq.s32.totalorder %s17, 0
    %p88 = por %p86, %p87
    %s89 = ssub.s32 %s18, %s30
    %s90 = ssub.s32 %s19, %s26
    %s91 = sor.u32 %s89, %s90
    %p92 = scmp.eq.s32.totalorder %s91, 0
    %s94 = sadd.s32 %s93, 1
    %s95 = scalar_select %p92, %s93, %s94
    %p98 = pneg %p92
    %p99 = scmp.eq.s32.totalorder %s11, 1
    %p100 = por %p98, %p99
    %p101 = scmp.ne.s32.totalorder %s93, %s96
    %p102 = scmp.eq.s32.totalorder %s11, 0
    %p103 = por %p101, %p102
    %p104 = scmp.ne.s32.totalorder %s93, %s96
    %p105 = scmp.eq.s32.totalorder %s16, 1
    %p106 = por %p104, %p105
    %p107 = scmp.ne.s32.totalorder %s96, %s97
    %p108 = scmp.eq.s32.totalorder %s16, 0
    %p109 = por %p107, %p108
    %p110 = scmp.ne.s32.totalorder %s96, %s97
    %p111 = scmp.eq.s32.totalorder %s17, 1
    %p112 = por %p110, %p111
    %p114 = scmp.ne.s32.totalorder %s97, %s113
    %p115 = scmp.eq.s32.totalorder %s17, 0
    %p116 = por %p114, %p115
    %s117 = sadd.s32 %s19, 1
    %s118 = sadd.s32 %s26, 1
    %s119 = ssub.s32 %s18, %s30
    %s120 = ssub.s32 %s117, %s118
    %s121 = sor.u32 %s119, %s120
    %p122 = scmp.eq.s32.totalorder %s121, 0
    %s124 = sadd.s32 %s123, 1
    %s125 = scalar_select %p122, %s123, %s124
    %p128 = pneg %p122
    %p129 = scmp.eq.s32.totalorder %s11, 1
    %p130 = por %p128, %p129
    %p131 = scmp.ne.s32.totalorder %s123, %s126
    %p132 = scmp.eq.s32.totalorder %s11, 0
    %p133 = por %p131, %p132
    %p134 = scmp.ne.s32.totalorder %s123, %s126
    %p135 = scmp.eq.s32.totalorder %s16, 1
    %p136 = por %p134, %p135
    %p137 = scmp.ne.s32.totalorder %s126, %s127
    %p138 = scmp.eq.s32.totalorder %s16, 0
    %p139 = por %p137, %p138
    %p140 = scmp.ne.s32.totalorder %s126, %s127
    %p141 = scmp.eq.s32.totalorder %s17, 1
    %p142 = por %p140, %p141
    %p144 = scmp.ne.s32.totalorder %s127, %s143
    %p145 = scmp.eq.s32.totalorder %s17, 0
    %p146 = por %p144, %p145
    %s148 = sadd.s32 %s147, 1
    %p151 = scmp.eq.s32.totalorder %s11, 1
    %p152 = scmp.ne.s32.totalorder %s147, %s149
    %p153 = scmp.eq.s32.totalorder %s11, 0
    %p154 = por %p152, %p153
    %p155 = scmp.ne.s32.totalorder %s147, %s149
    %p156 = scmp.eq.s32.totalorder %s16, 1
    %p157 = por %p155, %p156
    %p158 = scmp.ne.s32.totalorder %s149, %s150
    %p159 = scmp.eq.s32.totalorder %s16, 0
    %p160 = por %p158, %p159
    %p161 = scmp.ne.s32.totalorder %s149, %s150
    %p162 = scmp.eq.s32.totalorder %s17, 1
    %p163 = por %p161, %p162
    %p165 = scmp.ne.s32.totalorder %s150, %s164
    %p166 = scmp.eq.s32.totalorder %s17, 0
    %p167 = por %p165, %p166
    %s168 = ssub.s32 %s18, %s30
    %s169 = ssub.s32 %s19, %s26
    %s170 = sor.u32 %s168, %s169
    %p171 = scmp.eq.s32.totalorder %s170, 0
    %s173 = sadd.s32 %s172, 1
    %s174 = scalar_select %p171, %s172, %s173
    %p177 = pneg %p171
    %p178 = scmp.eq.s32.totalorder %s11, 1
    %p179 = por %p177, %p178
    %p180 = scmp.ne.s32.totalorder %s172, %s175
    %p181 = scmp.eq.s32.totalorder %s11, 0
    %p182 = por %p180, %p181
    %p183 = scmp.ne.s32.totalorder %s172, %s175
    %p184 = scmp.eq.s32.totalorder %s16, 1
    %p185 = por %p183, %p184
    %p186 = scmp.ne.s32.totalorder %s175, %s176
    %p187 = scmp.eq.s32.totalorder %s16, 0
    %p188 = por %p186, %p187
    %p189 = scmp.ne.s32.totalorder %s175, %s176
    %p190 = scmp.eq.s32.totalorder %s17, 1
    %p191 = por %p189, %p190
    %p193 = scmp.ne.s32.totalorder %s176, %s192
    %p194 = scmp.eq.s32.totalorder %s17, 0
    %p195 = por %p193, %p194
    %p196 = scmp.le.s32.totalorder 1, %s11
    %p197 = scmp.lt.s32.totalorder %s11, 3
    %p198 = pnand %p196, %p197
    %p199 = pneg %p198
    // Predicated region
    $region9: #{stft_loss.1} parent=5 // pred_check
      _
    $region10: #{stft_loss.1} parent=5 // pred_check_branch
      %201 = sbr.rel (%p198) target = $region12
    $region11: #{stft_loss.1} parent=5 // pred_region
      %s202 = ssub.s32 %s11, 1
      // Predicated region
      $region13: #{stft_loss.1} parent=11 // pred_check
        %p203 = pneg %p160
      $region14: #{stft_loss.1} parent=11 // pred_check_branch
        %205 = sbr.rel (%p203) target = $region16
      $region15: #{stft_loss.1} parent=11 // pred_region
        _
      $region16: #{stft_loss.1} parent=11 // pred_fallthru
        _
    $region12: #{stft_loss.1} parent=5 // pred_fallthru
      _
    %p206 = scmp.lt.s32.totalorder %s11, 2
    // Predicated region
    $region17: #{stft_loss.1} parent=5 // pred_check
      %p207 = pneg %p206
    $region18: #{stft_loss.1} parent=5 // pred_check_branch
      %209 = sbr.rel (%p207) target = $region20
    $region19: #{stft_loss.1} parent=5 // pred_region
      // Predicated region
      $region21: #{stft_loss.1} parent=19 // pred_check
        %p210 = pneg %p45
      $region22: #{stft_loss.1} parent=19 // pred_check_branch
        %212 = sbr.rel (%p210) target = $region24
      $region23: #{stft_loss.1} parent=19 // pred_region
        %s213 = smul.u32 2, %s19
        %p214 = scmp.lt.s32.totalorder %s18, 1
        %s215 = scalar_select %p214, %s18, 1
        %p216 = scmp.lt.s32.totalorder %s213, 3
        %s217 = scalar_select %p216, %s213, 3
        %s218 = smul.addr %s215, 4
        %s219 = sadd.s32 %s217, %s218
        %s220 = smul.addr %s219, 4
        %s221 = scalar_lea.vmem %s0, %s220
        %s222 = smul.u32 2, %s19
      $region24: #{stft_loss.1} parent=19 // pred_fallthru
        _
      // Predicated region
      $region25: #{stft_loss.1} parent=19 // pred_check
        %p223 = pneg %p75
      $region26: #{stft_loss.1} parent=19 // pred_check_branch
        %225 = sbr.rel (%p223) target = $region28
      $region27: #{stft_loss.1} parent=19 // pred_region
        %s226 = sadd.s32 %s19, 1
        %s227 = smul.u32 2, %s226
        %p228 = scmp.lt.s32.totalorder %s18, 1
        %s229 = scalar_select %p228, %s18, 1
        %p230 = scmp.lt.s32.totalorder %s227, 3
        %s231 = scalar_select %p230, %s227, 3
        %s232 = smul.addr %s229, 4
        %s233 = sadd.s32 %s231, %s232
        %s234 = smul.addr %s233, 4
        %s235 = scalar_lea.vmem %s1, %s234
        %s236 = sadd.s32 %s19, 1
        %s237 = smul.u32 2, %s236
      $region28: #{stft_loss.1} parent=19 // pred_fallthru
        _
      // Predicated region
      $region29: #{stft_loss.1} parent=19 // pred_check
        %p238 = pneg %p103
      $region30: #{stft_loss.1} parent=19 // pred_check_branch
        %240 = sbr.rel (%p238) target = $region32
      $region31: #{stft_loss.1} parent=19 // pred_region
        %s241 = smul.u32 2, %s19
        %p242 = scmp.lt.s32.totalorder %s18, 1
        %s243 = scalar_select %p242, %s18, 1
        %p244 = scmp.lt.s32.totalorder %s241, 3
        %s245 = scalar_select %p244, %s241, 3
        %s246 = smul.addr %s243, 4
        %s247 = sadd.s32 %s245, %s246
        %s248 = smul.addr %s247, 4
        %s249 = scalar_lea.vmem %s2, %s248
        %s250 = smul.u32 2, %s19
      $region32: #{stft_loss.1} parent=19 // pred_fallthru
        _
      // Predicated region
      $region33: #{stft_loss.1} parent=19 // pred_check
        %p251 = pneg %p133
      $region34: #{stft_loss.1} parent=19 // pred_check_branch
        %253 = sbr.rel (%p251) target = $region36
      $region35: #{stft_loss.1} parent=19 // pred_region
        %s254 = sadd.s32 %s19, 1
        %s255 = smul.u32 2, %s254
        %p256 = scmp.lt.s32.totalorder %s18, 1
        %s257 = scalar_select %p256, %s18, 1
        %p258 = scmp.lt.s32.totalorder %s255, 3
        %s259 = scalar_select %p258, %s255, 3
        %s260 = smul.addr %s257, 4
        %s261 = sadd.s32 %s259, %s260
        %s262 = smul.addr %s261, 4
        %s263 = scalar_lea.vmem %s3, %s262
        %s264 = sadd.s32 %s19, 1
        %s265 = smul.u32 2, %s264
      $region36: #{stft_loss.1} parent=19 // pred_fallthru
        _
    $region20: #{stft_loss.1} parent=5 // pred_fallthru
      _
    %p266 = scmp.le.s32.totalorder 1, %s11
    %p267 = scmp.lt.s32.totalorder %s11, 3
    %p268 = pnand %p266, %p267
    %p269 = pneg %p268
    // Predicated region
    $region37: #{stft_loss.1} parent=5 // pred_check
      _
    $region38: #{stft_loss.1} parent=5 // pred_check_branch
      %271 = sbr.rel (%p268) target = $region40
    $region39: #{stft_loss.1} parent=5 // pred_region
      %s272 = ssub.s32 %s11, 1
      %s273 = smul.u32 2, %s21
      %p274 = scmp.lt.s32.totalorder %s20, 1
      %s275 = scalar_select %p274, %s20, 1
      %p276 = scmp.lt.s32.totalorder %s273, 3
      %s277 = scalar_select %p276, %s273, 3
      %s278 = smul.addr %s275, 4
      %s279 = sadd.s32 %s277, %s278
      %s280 = smul.addr %s279, 4
      %s281 = scalar_lea.vmem %s0, %s280
      %p282 = pneg %p51
      %p283 = pneg %p48
      %s284 = sadd.s32 %s21, 1
      %s285 = smul.u32 2, %s284
      %p286 = scmp.lt.s32.totalorder %s20, 1
      %s287 = scalar_select %p286, %s20, 1
      %p288 = scmp.lt.s32.totalorder %s285, 3
      %s289 = scalar_select %p288, %s285, 3
      %s290 = smul.addr %s287, 4
      %s291 = sadd.s32 %s289, %s290
      %s292 = smul.addr %s291, 4
      %s293 = scalar_lea.vmem %s1, %s292
      %p294 = pneg %p81
      %p295 = pneg %p78
      %s296 = smul.u32 2, %s21
      %p297 = scmp.lt.s32.totalorder %s20, 1
      %s298 = scalar_select %p297, %s20, 1
      %p299 = scmp.lt.s32.totalorder %s296, 3
      %s300 = scalar_select %p299, %s296, 3
      %s301 = smul.addr %s298, 4
      %s302 = sadd.s32 %s300, %s301
      %s303 = smul.addr %s302, 4
      %s304 = scalar_lea.vmem %s2, %s303
      %p305 = pneg %p109
      %p306 = pneg %p106
      %s307 = sadd.s32 %s21, 1
      %s308 = smul.u32 2, %s307
      %p309 = scmp.lt.s32.totalorder %s20, 1
      %s310 = scalar_select %p309, %s20, 1
      %p311 = scmp.lt.s32.totalorder %s308, 3
      %s312 = scalar_select %p311, %s308, 3
      %s313 = smul.addr %s310, 4
      %s314 = sadd.s32 %s312, %s313
      %s315 = smul.addr %s314, 4
      %s316 = scalar_lea.vmem %s3, %s315
      %p317 = pneg %p139
      %p318 = pneg %p136
      %p319 = pneg %p160
      %p320 = pneg %p157
      %p321 = pneg %p188
      %p322 = pneg %p185
      %p323 = scmp.lt.s32.totalorder %s20, 1
      %s324 = scalar_select %p323, %s20, 1
      %p325 = scmp.lt.s32.totalorder %s21, 0
      %s326 = scalar_select %p325, %s21, 0
      %s327 = smul.addr %s326, 3
      %s328 = smul.addr %s324, 3
      %s329 = sadd.s32 %s327, %s328
      %s330 = smul.addr %s329, 8
      %s331 = scalar_lea.vmem %s5, %s330
      %s332 = smul.u32 2, %s21
      %p333 = scmp.lt.s32.totalorder %s20, 1
      %s334 = scalar_select %p333, %s20, 1
      %p335 = scmp.lt.s32.totalorder %s332, 3
      %s336 = scalar_select %p335, %s332, 3
      %s337 = smul.addr %s334, 4
      %s338 = sadd.s32 %s336, %s337
      %s339 = smul.addr %s338, 4
      %s340 = scalar_lea.vmem %s0, %s339
      %s341 = smul.u32 2, %s21
      %s342 = sadd.s32 %s21, 1
      %s343 = smul.u32 2, %s342
      %p344 = scmp.lt.s32.totalorder %s20, 1
      %s345 = scalar_select %p344, %s20, 1
      %p346 = scmp.lt.s32.totalorder %s343, 3
      %s347 = scalar_select %p346, %s343, 3
      %s348 = smul.addr %s345, 4
      %s349 = sadd.s32 %s347, %s348
      %s350 = smul.addr %s349, 4
      %s351 = scalar_lea.vmem %s1, %s350
      %s352 = sadd.s32 %s21, 1
      %s353 = smul.u32 2, %s352
      %s354 = smul.u32 2, %s21
      %p355 = scmp.lt.s32.totalorder %s20, 1
      %s356 = scalar_select %p355, %s20, 1
      %p357 = scmp.lt.s32.totalorder %s354, 3
      %s358 = scalar_select %p357, %s354, 3
      %s359 = smul.addr %s356, 4
      %s360 = sadd.s32 %s358, %s359
      %s361 = smul.addr %s360, 4
      %s362 = scalar_lea.vmem %s2, %s361
      %s363 = smul.u32 2, %s21
      %s364 = sadd.s32 %s21, 1
      %s365 = smul.u32 2, %s364
      %p366 = scmp.lt.s32.totalorder %s20, 1
      %s367 = scalar_select %p366, %s20, 1
      %p368 = scmp.lt.s32.totalorder %s365, 3
      %s369 = scalar_select %p368, %s365, 3
      %s370 = smul.addr %s367, 4
      %s371 = sadd.s32 %s369, %s370
      %s372 = smul.addr %s371, 4
      %s373 = scalar_lea.vmem %s3, %s372
      %s374 = sadd.s32 %s21, 1
      %s375 = smul.u32 2, %s374
      %p376 = scmp.lt.s32.totalorder %s20, 1
      %s377 = scalar_select %p376, %s20, 1
      %p378 = scmp.lt.s32.totalorder %s21, 0
      %s379 = scalar_select %p378, %s21, 0
      %s380 = smul.addr %s379, 3
      %s381 = smul.addr %s377, 3
      %s382 = sadd.s32 %s380, %s381
      %s383 = smul.addr %s382, 8
      %s384 = scalar_lea.vmem %s5, %s383
      %v386 = vld [vmem:[%s340] sm:$0xf]
      %v387 = vld [vmem:[%s340 + $0x4] sm:$0xf]
      %vm388 = vcmask 125952
      %389 = vst.msk [vmem:[#allocation2] sm:$0xf] %vm388, %v386
      %390 = vst.msk [vmem:[#allocation2 + $0x4] sm:$0xf] %vm388, %v387
      %v391 = vld [vmem:[%s340] sm:$0xf]
      %v392 = vld [vmem:[%s340 + $0x4] sm:$0xf]
      %vm393 = vsmask.f32 3328
      %vm394 = vsmask.f32 7440
      %vm395 = vmor %vm393, %vm394
      %v397 = vshrl.u32 %v391, 16
      %v399 = vrot.slane %v397, 4
      %v400 = vshll.u32 %v391, 16
      %v402 = vrot.slane %v400, 5
      %v403 = vor.u32 %v399, %v402
      %v404 = vrot.slane %v403, 4
      %v406 = vshll.u32 %v392, 16
      %v408 = vrot.slane %v406, 5
      %v409 = vsel %vm395, %v404, %v408
      %v410 = vshrl.u32 %v392, 16
      %v412 = vrot.slane %v410, 4
      %v413 = vor.u32 %v412, %v408
      %v414 = vrot.slane %v413, 4
      %415 = vrot.lane.b32.xlu0 %v409, 16
      %v416 = vpop.permute.xlu0 %415
      %417 = vrot.lane.b32.xlu0 %v414, 16
      %v418 = vpop.permute.xlu0 %417
      %vm421 = vcmask 257152
      %422 = vst.msk [vmem:[#allocation2] sm:$0xf] %vm421, %v416
      %vm423 = vcmask 257152
      %vm424 = vmand %vm423, %vm393
      %v425 = vld [vmem:[#allocation2 + $0x4] sm:$0xf]
      %v426 = vsel %vm424, %v418, %v425
      %427 = vst [vmem:[#allocation2 + $0x4] sm:$0xf] %v426
      %v428 = vld [vmem:[%s351] sm:$0x1]
      %v430 = vshll.u32 %v428, 16
      %v432 = vrot.slane %v430, 5
      %433 = vrot.lane.b32.xlu0 %v432, 16
      %v434 = vpop.permute.xlu0 %433
      %vm436 = vcmask 257155
      %vm437 = vsmask.f32 7950
      %vm438 = vmand %vm436, %vm437
      %v439 = vld [vmem:[#allocation2 + $0x4] sm:$0x8]
      %v440 = vsel %vm438, %v434, %v439
      %441 = vst [vmem:[#allocation2 + $0x4] sm:$0x8] %v440
      %v442 = vld [vmem:[%s340] sm:$0xe]
      %v443 = vld [vmem:[%s340 + $0x4] sm:$0xf]
      %vm446 = vcmask 1042432
      %vm447 = vcmask 1046532
      %vm448 = vmor %vm446, %vm447
      %v449 = vrot.slane %v442, 5
      %v450 = vrot.slane %v449, 4
      %v451 = vrot.slane %v443, 5
      %v452 = vsel %vm448, %v450, %v451
      %v453 = vrot.slane %v451, 4
      %454 = vrot.lane.b32.xlu0 %v452, 32
      %v455 = vpop.permute.xlu0 %454
      %456 = vrot.lane.b32.xlu0 %v453, 32
      %v457 = vpop.permute.xlu0 %456
      %vm460 = vcmask 388352
      %461 = vst.msk [vmem:[#allocation2] sm:$0xf] %vm460, %v455
      %vm462 = vcmask 387328
      %463 = vst.msk [vmem:[#allocation2 + $0x4] sm:$0x7] %vm462, %v457
      %v464 = vld [vmem:[%s351] sm:$0x1]
      %v466 = vrot.slane %v464, 5
      %467 = vrot.lane.b32.xlu0 %v466, 32
      %v468 = vpop.permute.xlu0 %467
      %vm470 = vcmask 388355
      %471 = vst.msk [vmem:[#allocation2 + $0x4] sm:$0x8] %vm470, %v468
      %v472 = vld [vmem:[%s340] sm:$0xe]
      %v473 = vld [vmem:[%s340 + $0x4] sm:$0xf]
      %vm474 = vsmask.f32 2304
      %vm475 = vsmask.f32 6416
      %vm476 = vmor %vm474, %vm475
      %v478 = vshrl.u32 %v472, 16
      %v480 = vrot.slane %v478, 5
      %v481 = vshll.u32 %v472, 16
      %v483 = vrot.slane %v481, 6
      %v484 = vor.u32 %v480, %v483
      %v485 = vrot.slane %v484, 4
      %v487 = vshrl.u32 %v473, 16
      %v489 = vrot.slane %v487, 5
      %v490 = vshll.u32 %v473, 16
      %v492 = vrot.slane %v490, 6
      %v493 = vor.u32 %v489, %v492
      %v494 = vsel %vm476, %v485, %v493
      %v495 = vrot.slane %v493, 4
      %496 = vrot.lane.b32.xlu0 %v494, 48
      %v497 = vpop.permute.xlu0 %496
      %498 = vrot.lane.b32.xlu0 %v495, 48
      %v499 = vpop.permute.xlu0 %498
      %vm502 = vcmask 519552
      %503 = vst.msk [vmem:[#allocation2] sm:$0xf] %vm502, %v497
      %vm504 = vcmask 518528
      %vm505 = vmand %vm504, %vm474
      %v506 = vld [vmem:[#allocation2 + $0x4] sm:$0x7]
      %v507 = vsel %vm505, %v499, %v506
      %508 = vst [vmem:[#allocation2 + $0x4] sm:$0x7] %v507
      %v509 = vld [vmem:[%s351] sm:$0x3]
      %v511 = vshrl.u32 %v509, 16
      %v513 = vrot.slane %v511, 5
      %v514 = vshll.u32 %v509, 16
      %v516 = vrot.slane %v514, 6
      %v517 = vor.u32 %v513, %v516
      %518 = vrot.lane.b32.xlu0 %v517, 48
      %v519 = vpop.permute.xlu0 %518
      %vm521 = vcmask 519554
      %vm522 = vsmask.f32 7946
      %vm523 = vmand %vm521, %vm522
      %v524 = vld [vmem:[#allocation2 + $0x4] sm:$0xc]
      %v525 = vsel %vm523, %v519, %v524
      %526 = vst [vmem:[#allocation2 + $0x4] sm:$0xc] %v525
      %v527 = vld [vmem:[%s362] sm:$0xf]
      %v528 = vld [vmem:[%s362 + $0x4] sm:$0xf]
      %529 = vst.msk [vmem:[#allocation2 + $0x8] sm:$0xf] %vm388, %v527
      %530 = vst.msk [vmem:[#allocation2 + $0xc] sm:$0xf] %vm388, %v528
      %v531 = vld [vmem:[%s362] sm:$0xf]
      %v532 = vld [vmem:[%s362 + $0x4] sm:$0xf]
      %v534 = vshrl.u32 %v531, 16
      %v536 = vrot.slane %v534, 4
      %v537 = vshll.u32 %v531, 16
      %v539 = vrot.slane %v537, 5
      %v540 = vor.u32 %v536, %v539
      %v541 = vrot.slane %v540, 4
      %v543 = vshll.u32 %v532, 16
      %v545 = vrot.slane %v543, 5
      %v546 = vsel %vm395, %v541, %v545
      %v547 = vshrl.u32 %v532, 16
      %v549 = vrot.slane %v547, 4
      %v550 = vor.u32 %v549, %v545
      %v551 = vrot.slane %v550, 4
      %552 = vrot.lane.b32.xlu0 %v546, 16
      %v553 = vpop.permute.xlu0 %552
      %554 = vrot.lane.b32.xlu0 %v551, 16
      %v555 = vpop.permute.xlu0 %554
      %558 = vst.msk [vmem:[#allocation2 + $0x8] sm:$0xf] %vm421, %v553
      %v559 = vld [vmem:[#allocation2 + $0xc] sm:$0xf]
      %v560 = vsel %vm424, %v555, %v559
      %561 = vst [vmem:[#allocation2 + $0xc] sm:$0xf] %v560
      %v562 = vld [vmem:[%s373] sm:$0x1]
      %v564 = vshll.u32 %v562, 16
      %v566 = vrot.slane %v564, 5
      %567 = vrot.lane.b32.xlu0 %v566, 16
      %v568 = vpop.permute.xlu0 %567
      %v570 = vld [vmem:[#allocation2 + $0xc] sm:$0x8]
      %v571 = vsel %vm438, %v568, %v570
      %572 = vst [vmem:[#allocation2 + $0xc] sm:$0x8] %v571
      %v573 = vld [vmem:[%s362] sm:$0xe]
      %v574 = vld [vmem:[%s362 + $0x4] sm:$0xf]
      %v577 = vrot.slane %v573, 5
      %v578 = vrot.slane %v577, 4
      %v579 = vrot.slane %v574, 5
      %v580 = vsel %vm448, %v578, %v579
      %v581 = vrot.slane %v579, 4
      %582 = vrot.lane.b32.xlu0 %v580, 32
      %v583 = vpop.permute.xlu0 %582
      %584 = vrot.lane.b32.xlu0 %v581, 32
      %v585 = vpop.permute.xlu0 %584
      %588 = vst.msk [vmem:[#allocation2 + $0x8] sm:$0xf] %vm460, %v583
      %589 = vst.msk [vmem:[#allocation2 + $0xc] sm:$0x7] %vm462, %v585
      %v590 = vld [vmem:[%s373] sm:$0x1]
      %v592 = vrot.slane %v590, 5
      %593 = vrot.lane.b32.xlu0 %v592, 32
      %v594 = vpop.permute.xlu0 %593
      %596 = vst.msk [vmem:[#allocation2 + $0xc] sm:$0x8] %vm470, %v594
      %v597 = vld [vmem:[%s362] sm:$0xe]
      %v598 = vld [vmem:[%s362 + $0x4] sm:$0xf]
      %v600 = vshrl.u32 %v597, 16
      %v602 = vrot.slane %v600, 5
      %v603 = vshll.u32 %v597, 16
      %v605 = vrot.slane %v603, 6
      %v606 = vor.u32 %v602, %v605
      %v607 = vrot.slane %v606, 4
      %v609 = vshrl.u32 %v598, 16
      %v611 = vrot.slane %v609, 5
      %v612 = vshll.u32 %v598, 16
      %v614 = vrot.slane %v612, 6
      %v615 = vor.u32 %v611, %v614
      %v616 = vsel %vm476, %v607, %v615
      %v617 = vrot.slane %v615, 4
      %618 = vrot.lane.b32.xlu0 %v616, 48
      %v619 = vpop.permute.xlu0 %618
      %620 = vrot.lane.b32.xlu0 %v617, 48
      %v621 = vpop.permute.xlu0 %620
      %624 = vst.msk [vmem:[#allocation2 + $0x8] sm:$0xf] %vm502, %v619
      %v625 = vld [vmem:[#allocation2 + $0xc] sm:$0x7]
      %v626 = vsel %vm505, %v621, %v625
      %627 = vst [vmem:[#allocation2 + $0xc] sm:$0x7] %v626
      %v628 = vld [vmem:[%s373] sm:$0x3]
      %v630 = vshrl.u32 %v628, 16
      %v632 = vrot.slane %v630, 5
      %v633 = vshll.u32 %v628, 16
      %v635 = vrot.slane %v633, 6
      %v636 = vor.u32 %v632, %v635
      %637 = vrot.lane.b32.xlu0 %v636, 48
      %v638 = vpop.permute.xlu0 %637
      %v640 = vld [vmem:[#allocation2 + $0xc] sm:$0xc]
      %v641 = vsel %vm523, %v638, %v640
      %642 = vst [vmem:[#allocation2 + $0xc] sm:$0xc] %v641
      %v643 = vld [vmem:[#allocation2] sm:$0xf]
      %v644 = vld [vmem:[#allocation2 + $0x4] sm:$0xf]
      %v645 = vld [vmem:[#allocation2 + $0x8] sm:$0xf]
      %v646 = vld [vmem:[#allocation2 + $0xc] sm:$0xf]
      %v647 = vld [vmem:[%s4] sm:$0xff]
      %v648 = vld [vmem:[%s4 + $0x8] sm:$0xff]
      %v649 = vld [vmem:[%s4 + $0x10] sm:$0xff]
      %v650 = vld [vmem:[%s4 + $0x18] sm:$0xff]
      %v651 = vld [vmem:[%s4 + $0x20] sm:$0xff]
      %v652 = vld [vmem:[%s4 + $0x28] sm:$0xff]
      %v653 = vld [vmem:[%s4 + $0x30] sm:$0xff]
      %v654 = vld [vmem:[%s4 + $0x38] sm:$0xff]
      %v659 = vunpack.c.l.b16 %v643
      %v660 = vunpack.c.l.b16 %v644
      %v661 = vunpack.c.l.b16 %v645
      %v662 = vunpack.c.l.b16 %v646
      %v663 = vpack.c.b16 %v660, %v659
      %v664 = vpack.c.b16 %v662, %v661
      %v673 = vunpack.c.l.b16 %v647
      %v674 = vunpack.c.h.b16 %v647
      %v675 = vunpack.c.l.b16 %v648
      %v676 = vunpack.c.h.b16 %v648
      %v677 = vunpack.c.l.b16 %v649
      %v678 = vunpack.c.h.b16 %v649
      %v679 = vunpack.c.l.b16 %v650
      %v680 = vunpack.c.h.b16 %v650
      %v681 = vunpack.c.l.b16 %v651
      %v682 = vunpack.c.h.b16 %v651
      %v683 = vunpack.c.l.b16 %v652
      %v684 = vunpack.c.h.b16 %v652
      %v685 = vunpack.c.l.b16 %v653
      %v686 = vunpack.c.h.b16 %v653
      %v687 = vunpack.c.l.b16 %v654
      %v688 = vunpack.c.h.b16 %v654
      %v689 = vpack.c.b16 %v675, %v673
      %v690 = vpack.c.b16 %v676, %v674
      %v691 = vpack.c.b16 %v679, %v677
      %v692 = vpack.c.b16 %v680, %v678
      %v693 = vpack.c.b16 %v683, %v681
      %v694 = vpack.c.b16 %v684, %v682
      %v695 = vpack.c.b16 %v687, %v685
      %v696 = vpack.c.b16 %v688, %v686
      %vm705 = vcmask 523264
      %v707 = vsel %vm705, %v663, 0
      %v710 = vsel %vm705, %v664, 0
      %712 = vmatpush.bf16.msra.mxu0 0
      %713 = vmatpush.bf16.msra.mxu0 0
      %714 = vmatpush.bf16.msra.mxu0 0
      %715 = vmatpush.bf16.msra.mxu0 0
      %716 = vmatpush.bf16.msra.mxu0 %v695
      %717 = vmatpush.bf16.msra.mxu0 %v693
      %718 = vmatpush.bf16.msra.mxu0 %v691
      %719 = vmatpush.bf16.msra.mxu0 %v689
      %720 = vmatmul.bf16.gmra.mxu0 %v707
      %v721 = vpop.f32.mrf.mxu0
      %v722 = vadd.f32 0.0, %v721
      %v723 = vpop.f32.mrf.mxu0
      %v724 = vadd.f32 0.0, %v723
      %725 = vmatmul.bf16.gmra.mxu0 %v710
      %v726 = vpop.f32.mrf.mxu0
      %v727 = vadd.f32 0.0, %v726
      %v728 = vpop.f32.mrf.mxu0
      %v729 = vadd.f32 0.0, %v728
      %730 = vdwg.mxu0
      %731 = vmatpush.bf16.msra.mxu0 0
      %732 = vmatpush.bf16.msra.mxu0 0
      %733 = vmatpush.bf16.msra.mxu0 0
      %734 = vmatpush.bf16.msra.mxu0 0
      %735 = vmatpush.bf16.msra.mxu0 %v696
      %736 = vmatpush.bf16.msra.mxu0 %v694
      %737 = vmatpush.bf16.msra.mxu0 %v692
      %738 = vmatpush.bf16.msra.mxu0 %v690
      %739 = vmatmul.bf16.gmra.mxu0 %v707
      %v740 = vpop.f32.mrf.mxu0
      %v741 = vadd.f32 0.0, %v740
      %v742 = vpop.f32.mrf.mxu0
      %v743 = vadd.f32 0.0, %v742
      %744 = vmatmul.bf16.gmra.mxu0 %v710
      %v745 = vpop.f32.mrf.mxu0
      %v746 = vadd.f32 0.0, %v745
      %v747 = vpop.f32.mrf.mxu0
      %v748 = vadd.f32 0.0, %v747
      %749 = vdwg.mxu0
      %v750 = vmul.f32 %v722, %v722
      %v751 = vmul.f32 %v724, %v724
      %v752 = vmul.f32 %v741, %v741
      %v753 = vmul.f32 %v743, %v743
      %v754 = vadd.f32 %v750, %v752
      %v755 = vadd.f32 %v751, %v753
      %v756 = vmul.f32 %v727, %v727
      %v757 = vmul.f32 %v729, %v729
      %v758 = vmul.f32 %v746, %v746
      %v759 = vmul.f32 %v748, %v748
      %v760 = vadd.f32 %v756, %v758
      %v761 = vadd.f32 %v757, %v759
      %v762 = vadd.f32 %v754, %v760
      %v763 = vadd.f32 %v755, %v761
      %v764 = vmul.f32 %v754, %v760
      %v765 = vmul.f32 %v755, %v761
      %v766 = vrsqrt.pop %v764
      %v767 = vmul.f32 %v766, %v764
      %v768 = vmul.f32 %v767, %v766
      %v769 = vmul.f32 0.5, %v768
      %v770 = vsub.f32 1.5, %v769
      %v771 = vmul.f32 %v766, %v770
      %v772 = vmul.f32 %v764, %v771
      %vm773 = vcmp.eq.f32.partialorder %v764, inf
      %v774 = vsel %vm773, %v764, %v772
      %vm775 = vcmp.eq.f32.partialorder %v764, 0.0
      %v776 = vand.u32 %v764, 2147483648
      %v777 = vsel %vm775, %v776, %v774
      %v778 = vrsqrt.pop %v765
      %v779 = vmul.f32 %v778, %v765
      %v780 = vmul.f32 %v779, %v778
      %v781 = vmul.f32 0.5, %v780
      %v782 = vsub.f32 1.5, %v781
      %v783 = vmul.f32 %v778, %v782
      %v784 = vmul.f32 %v765, %v783
      %vm785 = vcmp.eq.f32.partialorder %v765, inf
      %v786 = vsel %vm785, %v765, %v784
      %vm787 = vcmp.eq.f32.partialorder %v765, 0.0
      %v788 = vand.u32 %v765, 2147483648
      %v789 = vsel %vm787, %v788, %v786
      %v790 = vmul.f32 %v777, 2.0
      %v791 = vmul.f32 %v789, 2.0
      %v792 = vsub.f32 %v762, %v790
      %v793 = vsub.f32 %v763, %v791
      %v794 = vadd.f32 %v754, 1e-12
      %v795 = vadd.f32 %v755, 1e-12
      %v796 = vlog2.pop %v794
      %v797 = vmul.f32 %v796, 0.6931472
      %v798 = vlog2.pop %v795
      %v799 = vmul.f32 %v798, 0.6931472
      %v800 = vadd.f32 %v760, 1e-12
      %v801 = vadd.f32 %v761, 1e-12
      %v802 = vlog2.pop %v800
      %v803 = vmul.f32 %v802, 0.6931472
      %v804 = vlog2.pop %v801
      %v805 = vmul.f32 %v804, 0.6931472
      %v806 = vsub.f32 %v797, %v803
      %v807 = vsub.f32 %v799, %v805
      %v808 = vand.u32 2147483647, %v806
      %v809 = vand.u32 2147483647, %v807
      %v810 = vmul.f32 %v808, 0.5
      %v811 = vmul.f32 %v809, 0.5
      %v812 = vadd.f32 %v792, %v793
      %813 = vst [vmem:[%s384] sm:$0xff] %v812
      %v814 = vadd.f32 %v760, %v761
      %s815 = scalar_lea.vmem %s384, 8
      %816 = vst [vmem:[%s815] sm:$0xff] %v814
      %v817 = vadd.f32 %v810, %v811
      %s818 = scalar_lea.vmem %s384, 16
      %819 = vst [vmem:[%s818] sm:$0xff] %v817
      %p820 = scmp.lt.s32.totalorder %s20, 1
      %s821 = scalar_select %p820, %s20, 1
      %p822 = scmp.lt.s32.totalorder %s21, 0
      %s823 = scalar_select %p822, %s21, 0
      %s824 = smul.addr %s823, 3
      %s825 = smul.addr %s821, 3
      %s826 = sadd.s32 %s824, %s825
      %s827 = smul.addr %s826, 8
      %s828 = scalar_lea.vmem %s5, %s827
      // Predicated region
      $region41: #{stft_loss.1} parent=39 // pred_check
        %p829 = pneg %p185
      $region42: #{stft_loss.1} parent=39 // pred_check_branch
        %831 = sbr.rel (%p829) target = $region44
      $region43: #{stft_loss.1} parent=39 // pred_region
        _
      $region44: #{stft_loss.1} parent=39 // pred_fallthru
        _
    $region40: #{stft_loss.1} parent=5 // pred_fallthru
      _
    %p832 = scmp.le.s32.totalorder 2, %s11
    // Predicated region
    $region45: #{stft_loss.1} parent=5 // pred_check
      %p833 = pneg %p832
    $region46: #{stft_loss.1} parent=5 // pred_check_branch
      %835 = sbr.rel (%p833) target = $region48
    $region47: #{stft_loss.1} parent=5 // pred_region
      %s836 = ssub.s32 %s11, 2
      // Predicated region
      $region49: #{stft_loss.1} parent=47 // pred_check
        %p837 = pneg %p191
      $region50: #{stft_loss.1} parent=47 // pred_check_branch
        %839 = sbr.rel (%p837) target = $region52
      $region51: #{stft_loss.1} parent=47 // pred_region
        %p840 = scmp.lt.s32.totalorder %s22, 1
        %s841 = scalar_select %p840, %s22, 1
        %p842 = scmp.lt.s32.totalorder %s23, 0
        %s843 = scalar_select %p842, %s23, 0
        %s844 = smul.addr %s843, 3
        %s845 = smul.addr %s841, 3
        %s846 = sadd.s32 %s844, %s845
        %s847 = smul.addr %s846, 8
        %s848 = scalar_lea.vmem %s5, %s847
      $region52: #{stft_loss.1} parent=47 // pred_fallthru
        _
    $region48: #{stft_loss.1} parent=5 // pred_fallthru
      _
  $region6: #{stft_loss.1} parent=0 // loop_footer
    %s15 = sadd.s32 1, %s11
  $region7: #{stft_loss.1} parent=0 // loop_footer_branch
    %10 = sbr.rel target = $region3
  $region8: #{stft_loss.1} parent=0 // loop_exit
    _

</llo_original>
